<compile_context>
chip_gen: v6e
topology: v6e:2x2x1
jax: 0.10.0
libtpu: 0.0.40
codegen_flags: <defaults>
</compile_context>

<pallas_src>
import functools

import jax
import jax.numpy as jnp
from jax.experimental import pallas as pl
from jax.experimental.pallas import tpu as pltpu

LANES = 128


def _num_tensorcores():
    """Best-effort TensorCores per chip: 2 on v7x, 1 on v5e/v6e."""
    try:
        kind = jax.devices()[0].device_kind.lower()
        if "v7" in kind:
            return 2
    except Exception:
        pass
    return 1


def _modulator(one_minus_pt, gamma):
    """(1 - pt)**gamma, using repeated multiplies for small integer gamma."""
    g = float(gamma)
    if g == 0.0:
        return jnp.ones_like(one_minus_pt)
    if g.is_integer() and 1.0 <= g <= 4.0:
        out = one_minus_pt
        for _ in range(int(g) - 1):
            out = out * one_minus_pt
        return out
    return one_minus_pt ** g


def _focal_elems(x, t, alpha, gamma):
    """Per-element focal loss (stable BCE-with-logits, matches PyTorch).

    General path: valid for soft targets as well. 2 exps + 1 log1p per elem.
    """
    x = x.astype(jnp.float32)
    t = t.astype(jnp.float32)
    bce = jnp.maximum(x, 0.0) - x * t + jnp.log1p(jnp.exp(-jnp.abs(x)))
    pt = jnp.exp(-bce)
    out = _modulator(1.0 - pt, gamma) * bce
    if float(alpha) != 1.0:
        out = float(alpha) * out
    return out


def _focal_elems_binary(x, t, alpha, gamma):
    """Fast path, exact ONLY for hard {0,1} targets.

    Uses 1 - pt = sigmoid((1-2t)*x): one exp, one log1p and a near-free
    approx reciprocal (EUP slot) instead of a second full exp.
    """
    x = x.astype(jnp.float32)
    t = t.astype(jnp.float32)
    e = jnp.exp(-jnp.abs(x))          # exp(-|x|)
    z = (2.0 * t - 1.0) * x           # pt = sigmoid(z)
    bce = jnp.maximum(-z, 0.0) + jnp.log1p(e)
    one_minus_pt = jnp.where(z >= 0.0, e, 1.0) * pl.reciprocal(1.0 + e,
                                                               approx=True)
    out = _modulator(one_minus_pt, gamma) * bce
    if float(alpha) != 1.0:
        out = float(alpha) * out
    return out


def _focal_loss_kernel(x_ref, t_ref, o_ref, acc_ref, *, alpha, gamma, rows,
                       tile_rows, tiles_per_core, binary_targets):
    c = pl.program_id(0)  # core split ("parallel": both TCs on v7x)
    i = pl.program_id(1)  # sequential tiles handled by this core

    @pl.when(i == 0)
    def _init():
        acc_ref[...] = jnp.zeros_like(acc_ref)

    elem_fn = _focal_elems_binary if binary_targets else _focal_elems
    focal = elem_fn(x_ref[...], t_ref[...], alpha, gamma)

    g = c * tiles_per_core + i            # global tile index
    row_start = g * tile_rows
    is_partial = row_start + tile_rows > rows   # boundary or fully-OOB tile

    @pl.when(jnp.logical_not(is_partial))
    def _full_tile():
        # Fold the (tile_rows, 128) block onto the (8, 128) vreg accumulator:
        # pure whole-vreg VPU adds, no XLU, no large VMEM RMW.
        acc_ref[...] += focal.reshape(tile_rows // 8, 8, LANES).sum(axis=0)

    @pl.when(is_partial)
    def _partial_tile():
        # Edge blocks read Pallas pad rows / clamped duplicate tiles; mask them
        # (jnp.where selects, so garbage in pad rows cannot propagate).
        valid = rows - row_start          # may be <= 0 for fully-OOB tiles
        row_ids = jax.lax.broadcasted_iota(jnp.int32, focal.shape, 0)
        masked = jnp.where(row_ids < valid, focal, 0.0)
        acc_ref[...] += masked.reshape(tile_rows // 8, 8, LANES).sum(axis=0)

    @pl.when(i == pl.num_programs(1) - 1)
    def _finalize():
        o_ref[0, 0] = jnp.sum(acc_ref[...])


def focal_loss(inputs, targets, alpha=1.0, gamma=2.0, tile_rows=4096,
               binary_targets=False):
    """Mean focal loss over all elements of `inputs`/`targets`."""
    assert inputs.shape == targets.shape
    total = int(inputs.size)
    alpha = float(alpha)
    gamma = float(gamma)

    x_flat = inputs.reshape(-1)
    t_flat = targets.reshape(-1)

    rows = total // LANES
    main = rows * LANES
    tail = total - main

    # Non-lane-aligned tail (< 128 elements): negligible, compute in plain JAX.
    tail_sum = jnp.float32(0.0)
    if tail:
        tail_sum = jnp.sum(_focal_elems(x_flat[main:], t_flat[main:],
                                        alpha, gamma))
    if rows == 0:
        return tail_sum / jnp.float32(total)

    # Tile rows: multiple of 8 sublanes, clamped to the data so tiny inputs
    # don't allocate huge VMEM blocks; big inputs get the full 4096-row tile.
    tile_rows = -(-int(tile_rows) // 8) * 8
    tile_rows = max(8, min(tile_rows, -(-rows // 8) * 8))
    num_tiles = pl.cdiv(rows, tile_rows)

    n_cores = _num_tensorcores()         # 2-way split only on multi-TC chips
    tiles_per_core = pl.cdiv(num_tiles, n_cores)
    max_block = num_tiles - 1

    x2d = x_flat[:main].reshape(rows, LANES)
    t2d = t_flat[:main].reshape(rows, LANES)

    def in_map(c, i):
        # Clamp fully-OOB tile indices into range; the kernel masks them out.
        return (jnp.minimum(c * tiles_per_core + i, max_block), 0)

    kernel = functools.partial(
        _focal_loss_kernel,
        alpha=alpha, gamma=gamma, rows=rows,
        tile_rows=tile_rows, tiles_per_core=tiles_per_core,
        binary_targets=bool(binary_targets))

    n_elems = rows * LANES
    cost = pl.CostEstimate(
        flops=12 * n_elems,
        transcendentals=(2 if binary_targets else 3) * n_elems,
        bytes_accessed=n_elems * (x2d.dtype.itemsize + t2d.dtype.itemsize)
        + n_cores * 4)

    partial_sums = pl.pallas_call(
        kernel,
        out_shape=jax.ShapeDtypeStruct((n_cores, 1), jnp.float32),
        grid_spec=pltpu.PrefetchScalarGridSpec(
            num_scalar_prefetch=0,
            grid=(n_cores, tiles_per_core),
            in_specs=[
                pl.BlockSpec((tile_rows, LANES), in_map),
                pl.BlockSpec((tile_rows, LANES), in_map),
            ],
            out_specs=pl.BlockSpec((1, 1), lambda c, i: (c, 0),
                                   memory_space=pltpu.SMEM),
            # Single vreg-sized accumulator (4 KiB) instead of a full tile.
            scratch_shapes=[pltpu.VMEM((8, LANES), jnp.float32)],
        ),
        compiler_params=pltpu.CompilerParams(
            dimension_semantics=("parallel", "arbitrary"),
            vmem_limit_bytes=32 * 1024 * 1024),
        cost_estimate=cost,
    )(x2d, t2d)

    return (jnp.sum(partial_sums) + tail_sum) / jnp.float32(total)


def focal_loss_ref(inputs, targets, alpha=1.0, gamma=2.0):
    x = inputs.astype(jnp.float32)
    t = targets.astype(jnp.float32)
    bce = jnp.maximum(x, 0.0) - x * t + jnp.log1p(jnp.exp(-jnp.abs(x)))
    pt = jnp.exp(-bce)
    return jnp.mean(alpha * (1.0 - pt) ** gamma * bce)


if __name__ == "__main__":
    key = jax.random.PRNGKey(0)
    k1, k2 = jax.random.split(key)
    # NCHW logits and binary targets, like a segmentation head output.
    B, C, H, W = 2, 4, 16, 16
    inputs = jax.random.normal(k1, (B, C, H, W), dtype=jnp.float32)
    targets = jax.random.bernoulli(k2, p=0.3, shape=(B, C, H, W)).astype(
        jnp.float32
    )

    out = focal_loss(inputs, targets, alpha=1.0, gamma=2.0)
    out = jax.block_until_ready(out)

    ref = focal_loss_ref(inputs, targets, alpha=1.0, gamma=2.0)
    assert jnp.allclose(out, ref, rtol=1e-5, atol=1e-6), (out, ref)
    print("KERNEL_OK")
</pallas_src>

<mosaic_0001>
module attributes {stable_mosaic.version = 11 : i64} {
  func.func @_focal_loss_kernel(%arg0: i32, %arg1: i32, %arg2: memref<16x128xf32, #tpu.memory_space<vmem>>, %arg3: memref<16x128xf32, #tpu.memory_space<vmem>>, %arg4: memref<1x1xf32, #tpu.memory_space<smem>>, %arg5: memref<8x128xf32, #tpu.memory_space<vmem>>) attributes {dimension_semantics = [#tpu.dimension_semantics<parallel>, #tpu.dimension_semantics<arbitrary>], iteration_bounds = array<i64: 1, 1>, scalar_prefetch = 0 : i64, scratch_operands = 1 : i64, tpu.core_type = #tpu.core_type<tc>, window_params = [{transform_indices = @transform_0, window_bounds = array<i64: 16, 128>}, {transform_indices = @transform_1, window_bounds = array<i64: 16, 128>}, {transform_indices = @transform_2, window_bounds = array<i64: 1, 1>}]} {
    %c0_i32 = arith.constant 0 : i32
    %0 = arith.cmpi eq, %arg1, %c0_i32 : i32
    %1 = arith.extui %0 : i1 to i32
    %c0_i32_0 = arith.constant 0 : i32
    %2 = arith.cmpi ne, %1, %c0_i32_0 : i32
    scf.if %2 {
      %cst_13 = arith.constant 0.000000e+00 : f32
      %35 = vector.broadcast %cst_13 : f32 to vector<8x128xf32>
      %c0_14 = arith.constant 0 : index
      %c0_15 = arith.constant 0 : index
      %36 = vector.load %arg5[%c0_14, %c0_15] : memref<8x128xf32, #tpu.memory_space<vmem>>, vector<8x128xf32>
      tpu.vector_store %arg5[%c0_14, %c0_15], %35 {strides = array<i32>} : memref<8x128xf32, #tpu.memory_space<vmem>>, vector<8x128xf32>,
    } else {
    }
    %c0 = arith.constant 0 : index
    %c0_1 = arith.constant 0 : index
    %3 = vector.load %arg2[%c0, %c0_1] : memref<16x128xf32, #tpu.memory_space<vmem>>, vector<16x128xf32>
    %c0_2 = arith.constant 0 : index
    %c0_3 = arith.constant 0 : index
    %4 = vector.load %arg3[%c0_2, %c0_3] : memref<16x128xf32, #tpu.memory_space<vmem>>, vector<16x128xf32>
    %cst = arith.constant 0.000000e+00 : f32
    %5 = vector.broadcast %cst : f32 to vector<16x128xf32>
    %6 = arith.maximumf %3, %5 : vector<16x128xf32>
    %7 = arith.mulf %3, %4 : vector<16x128xf32>
    %8 = arith.subf %6, %7 : vector<16x128xf32>
    %9 = math.absf %3 : vector<16x128xf32>
    %cst_4 = arith.constant 0.000000e+00 : f32
    %10 = vector.broadcast %cst_4 : f32 to vector<16x128xf32>
    %11 = arith.subf %10, %9 : vector<16x128xf32>
    %12 = math.exp %11 : vector<16x128xf32>
    %13 = math.log1p %12 : vector<16x128xf32>
    %14 = arith.addf %8, %13 : vector<16x128xf32>
    %cst_5 = arith.constant 0.000000e+00 : f32
    %15 = vector.broadcast %cst_5 : f32 to vector<16x128xf32>
    %16 = arith.subf %15, %14 : vector<16x128xf32>
    %17 = math.exp %16 : vector<16x128xf32>
    %cst_6 = arith.constant 1.000000e+00 : f32
    %18 = vector.broadcast %cst_6 : f32 to vector<16x128xf32>
    %19 = arith.subf %18, %17 : vector<16x128xf32>
    %20 = arith.mulf %19, %19 : vector<16x128xf32>
    %21 = arith.mulf %20, %14 : vector<16x128xf32>
    %c1_i32 = arith.constant 1 : i32
    %22 = arith.muli %arg0, %c1_i32 : i32
    %23 = arith.addi %22, %arg1 : i32
    %c16_i32 = arith.constant 16 : i32
    %24 = arith.muli %23, %c16_i32 : i32
    %c16_i32_7 = arith.constant 16 : i32
    %25 = arith.addi %24, %c16_i32_7 : i32
    %c16_i32_8 = arith.constant 16 : i32
    %26 = arith.cmpi sgt, %25, %c16_i32_8 : i32
    %true = arith.constant true
    %27 = arith.xori %26, %true : i1
    %28 = arith.extui %27 : i1 to i32
    %c0_i32_9 = arith.constant 0 : i32
    %29 = arith.cmpi ne, %28, %c0_i32_9 : i32
    scf.if %29 {
      %c0_13 = arith.constant 0 : index
      %c0_14 = arith.constant 0 : index
      %35 = vector.load %arg5[%c0_13, %c0_14] : memref<8x128xf32, #tpu.memory_space<vmem>>, vector<8x128xf32>
      %36 = vector.shape_cast %21 : vector<16x128xf32> to vector<2x8x128xf32>
      %cst_15 = arith.constant dense<0.000000e+00> : vector<8x128xf32>
      %37 = vector.multi_reduction <add>, %36, %cst_15 [0] : vector<2x8x128xf32> to vector<8x128xf32>
      %38 = arith.addf %35, %37 : vector<8x128xf32>
      %c0_16 = arith.constant 0 : index
      %c0_17 = arith.constant 0 : index
      %39 = vector.load %arg5[%c0_16, %c0_17] : memref<8x128xf32, #tpu.memory_space<vmem>>, vector<8x128xf32>
      tpu.vector_store %arg5[%c0_16, %c0_17], %38 {strides = array<i32>} : memref<8x128xf32, #tpu.memory_space<vmem>>, vector<8x128xf32>,
    } else {
    }
    %30 = arith.extui %26 : i1 to i32
    %c0_i32_10 = arith.constant 0 : i32
    %31 = arith.cmpi ne, %30, %c0_i32_10 : i32
    scf.if %31 {
      %c16_i32_13 = arith.constant 16 : i32
      %35 = arith.subi %c16_i32_13, %24 : i32
      %36 = tpu.iota {dimensions = array<i32: 0>} : vector<16x128xi32>
      %37 = vector.broadcast %35 : i32 to vector<16x128xi32>
      %38 = arith.cmpi slt, %36, %37 : vector<16x128xi32>
      %cst_14 = arith.constant 0.000000e+00 : f32
      %39 = vector.broadcast %cst_14 : f32 to vector<16x128xf32>
      %40 = arith.select %38, %21, %39 : vector<16x128xi1>, vector<16x128xf32>
      %c0_15 = arith.constant 0 : index
      %c0_16 = arith.constant 0 : index
      %41 = vector.load %arg5[%c0_15, %c0_16] : memref<8x128xf32, #tpu.memory_space<vmem>>, vector<8x128xf32>
      %42 = vector.shape_cast %40 : vector<16x128xf32> to vector<2x8x128xf32>
      %cst_17 = arith.constant dense<0.000000e+00> : vector<8x128xf32>
      %43 = vector.multi_reduction <add>, %42, %cst_17 [0] : vector<2x8x128xf32> to vector<8x128xf32>
      %44 = arith.addf %41, %43 : vector<8x128xf32>
      %c0_18 = arith.constant 0 : index
      %c0_19 = arith.constant 0 : index
      %45 = vector.load %arg5[%c0_18, %c0_19] : memref<8x128xf32, #tpu.memory_space<vmem>>, vector<8x128xf32>
      tpu.vector_store %arg5[%c0_18, %c0_19], %44 {strides = array<i32>} : memref<8x128xf32, #tpu.memory_space<vmem>>, vector<8x128xf32>,
    } else {
    }
    %c0_i32_11 = arith.constant 0 : i32
    %32 = arith.cmpi eq, %arg1, %c0_i32_11 : i32
    %33 = arith.extui %32 : i1 to i32
    %c0_i32_12 = arith.constant 0 : i32
    %34 = arith.cmpi ne, %33, %c0_i32_12 : i32
    scf.if %34 {
      %c0_13 = arith.constant 0 : index
      %c0_14 = arith.constant 0 : index
      %35 = vector.load %arg5[%c0_13, %c0_14] : memref<8x128xf32, #tpu.memory_space<vmem>>, vector<8x128xf32>
      %36 = vector.shape_cast %35 : vector<8x128xf32> to vector<1x8x128xf32>
      %cst_15 = arith.constant dense<0.000000e+00> : vector<1xf32>
      %37 = vector.multi_reduction <add>, %36, %cst_15 [1, 2] : vector<1x8x128xf32> to vector<1xf32>
      %38 = vector.shape_cast %37 : vector<1xf32> to vector<1x1x1xf32>
      %39 = vector.extract %38[0, 0, 0] : f32 from vector<1x1x1xf32>
      %c0_16 = arith.constant 0 : index
      %c0_17 = arith.constant 0 : index
      %40 = memref.load %arg4[%c0_16, %c0_17] : memref<1x1xf32, #tpu.memory_space<smem>>
      memref.store %39, %arg4[%c0_16, %c0_17] : memref<1x1xf32, #tpu.memory_space<smem>>
    } else {
    }
    return
  }
  func.func @transform_0(%arg0: i32, %arg1: i32) -> (i32, i32) {
    %c1_i32 = arith.constant 1 : i32
    %0 = arith.muli %arg0, %c1_i32 : i32
    %1 = arith.addi %0, %arg1 : i32
    %c0_i32 = arith.constant 0 : i32
    %2 = arith.minsi %1, %c0_i32 : i32
    %c0_i32_0 = arith.constant 0 : i32
    %c0_i32_1 = arith.constant 0 : i32
    return %2, %c0_i32_0 : i32, i32
  }
  func.func @transform_1(%arg0: i32, %arg1: i32) -> (i32, i32) {
    %c1_i32 = arith.constant 1 : i32
    %0 = arith.muli %arg0, %c1_i32 : i32
    %1 = arith.addi %0, %arg1 : i32
    %c0_i32 = arith.constant 0 : i32
    %2 = arith.minsi %1, %c0_i32 : i32
    %c0_i32_0 = arith.constant 0 : i32
    %c0_i32_1 = arith.constant 0 : i32
    return %2, %c0_i32_0 : i32, i32
  }
  func.func @transform_2(%arg0: i32, %arg1: i32) -> (i32, i32) {
    %c0_i32 = arith.constant 0 : i32
    %c0_i32_0 = arith.constant 0 : i32
    return %arg0, %c0_i32 : i32, i32
  }
}

</mosaic_0001>

<llo_original>
// kernel: tpu_custom_call.1
$region0: #{tpu_custom_call.1}
  #allocation0 [shape = 'u32[]', space=smem, size = 0x4, offset = 0x4, fixed_abs, tag = 'smem constant byte address 0x4 - core index']
  #allocation1 [shape = 'u32[144,128]{1,0:T(1,128)}', space=vmem, size = 0x12000, scoped, tag = 'internal scratch']
  #allocation2 [shape = 'f32[8,128]{1,0:T(8,128)}', space=vmem, size = 0x1000, scoped, tag = 'scratch operand']
  %s0 = inlined_call_operand.hbm [shape: f32[16,128], index: 0, kind: input, shape index: {}]
  %s1 = inlined_call_operand.hbm [shape: f32[16,128], index: 1, kind: input, shape index: {}]
  %s2 = inlined_call_operand.hbm [shape: f32[1,1], index: 2, kind: output, shape index: {}]
  %s3 = sld [smem:[#allocation0]]
  $region42: #{tpu_custom_call.1} parent=0
    _
  %s5 = ssub.s32 1, %s3
  %s6 = scalar_select 0, %s5, %s3
  $region1: #{tpu_custom_call.1} parent=0
    #allocation3 [shape = 'u8[8192]{0}', space=vmem, size = 0x2000, scoped, tag = 'input window, operand 0, single buffered']
    #allocation4 [shape = 's32[1]{0}', space=sflag, size = 0x4, scoped, tag = 'scoped memory for tpu_custom_call.1']
    #allocation5 [shape = 's32[1]{0}', space=sflag, size = 0x4, scoped, tag = 'scoped memory for tpu_custom_call.1']
    #allocation6 [shape = 'u8[8192]{0}', space=vmem, size = 0x2000, scoped, tag = 'input window, operand 1, single buffered']
    #allocation7 [shape = 's32[1]{0}', space=sflag, size = 0x4, scoped, tag = 'scoped memory for tpu_custom_call.1']
    #allocation8 [shape = 'u8[512]{0}', space=smem, size = 0x200, scoped, tag = 'output window, operand 0, single buffered']
    %7 = vsyncpa [#allocation4], 0
    %8 = vsyncpa [#allocation7], 0
    %9 = vsyncpa [#allocation5], 0
    // Predicated region
    $region2: #{tpu_custom_call.1} parent=1 // pred_check
      _
    $region3: #{tpu_custom_call.1} parent=1 // pred_check_branch
      %11 = sbr.rel (0) target = $region5
    $region4: #{tpu_custom_call.1} parent=1 // pred_region
      %s12 = sadd.s32 0, 0
      %p13 = scmp.lt.s32.totalorder %s12, 0
      %s14 = scalar_select %p13, %s12, 0
      %s15 = smul.u32 2, %s14
      %s17 = ssub.s32 256, 256
      %18 = vsyncadd [#allocation4], %s17
      %s19 = smul.addr %s15, 128
      %s20 = scalar_lea.hbm %s0, %s19
      %s21 = sshll.u32 [#allocation3], 4
      %s22 = int_to_ptr.vmem [resolvable:$true] %s21
      %27 = dma.hbm_to_vmem [thread:$0]  %s20, 256, %s22, [#allocation4], 128, 128, 8
    $region5: #{tpu_custom_call.1} parent=1 // pred_fallthru
      _
    // Predicated region
    $region6: #{tpu_custom_call.1} parent=1 // pred_check
      _
    $region7: #{tpu_custom_call.1} parent=1 // pred_check_branch
      %29 = sbr.rel (0) target = $region9
    $region8: #{tpu_custom_call.1} parent=1 // pred_region
      %s30 = sadd.s32 0, 0
      %p31 = scmp.lt.s32.totalorder %s30, 0
      %s32 = scalar_select %p31, %s30, 0
      %s33 = smul.u32 2, %s32
      %s35 = ssub.s32 256, 256
      %36 = vsyncadd [#allocation7], %s35
      %s37 = smul.addr %s33, 128
      %s38 = scalar_lea.hbm %s1, %s37
      %s39 = sshll.u32 [#allocation6], 4
      %s40 = int_to_ptr.vmem [resolvable:$true] %s39
      %45 = dma.hbm_to_vmem [thread:$0]  %s38, 256, %s40, [#allocation7], 128, 128, 8
    $region9: #{tpu_custom_call.1} parent=1 // pred_fallthru
      _
    // Predicated region
    $region10: #{tpu_custom_call.1} parent=1 // pred_check
      _
    $region11: #{tpu_custom_call.1} parent=1 // pred_check_branch
      %47 = sbr.rel (0) target = $region13
    $region12: #{tpu_custom_call.1} parent=1 // pred_region
      %48 = dma.done [#allocation4], 256
    $region13: #{tpu_custom_call.1} parent=1 // pred_fallthru
      _
    // Predicated region
    $region14: #{tpu_custom_call.1} parent=1 // pred_check
      _
    $region15: #{tpu_custom_call.1} parent=1 // pred_check_branch
      %50 = sbr.rel (0) target = $region17
    $region16: #{tpu_custom_call.1} parent=1 // pred_region
      %51 = dma.done [#allocation7], 256
    $region17: #{tpu_custom_call.1} parent=1 // pred_fallthru
      _
    %s52 = sadd.s32 0, 0
    %p53 = scmp.lt.s32.totalorder %s52, 0
    %s54 = scalar_select %p53, %s52, 0
    %s55 = smul.u32 2, %s54
    %s56 = sadd.s32 0, 0
    %p57 = scmp.lt.s32.totalorder %s56, 0
    %s58 = scalar_select %p57, %s56, 0
    %s59 = smul.u32 2, %s58
    %p60 = scmp.eq.s32.totalorder 0, 0
    // Predicated region
    $region18: #{tpu_custom_call.1} parent=1 // pred_check
      %p61 = pneg %p60
    $region19: #{tpu_custom_call.1} parent=1 // pred_check_branch
      %63 = sbr.rel (%p61) target = $region21
    $region20: #{tpu_custom_call.1} parent=1 // pred_region
      %64 = vst [vmem:[#allocation2] sm:$0xff] 0.0
    $region21: #{tpu_custom_call.1} parent=1 // pred_fallthru
      _
    %v65 = vld [vmem:[#allocation3] sm:$0xff]
    %v66 = vld [vmem:[#allocation3 + $0x8] sm:$0xff]
    %v67 = vld [vmem:[#allocation6] sm:$0xff]
    %v68 = vld [vmem:[#allocation6 + $0x8] sm:$0xff]
    %v69 = vmax.f32 %v65, 0.0
    %v70 = vmax.f32 %v66, 0.0
    %v71 = vmul.f32 %v65, %v67
    %v72 = vmul.f32 %v66, %v68
    %v73 = vsub.f32 %v69, %v71
    %v74 = vsub.f32 %v70, %v72
    %v75 = vand.u32 2147483647, %v65
    %v76 = vand.u32 2147483647, %v66
    %v77 = vsub.f32 0.0, %v75
    %v78 = vsub.f32 0.0, %v76
    %v79 = vmul.f32 %v77, 1.442695
    %v80 = vpow.pop %v79
    %v81 = vmul.f32 %v78, 1.442695
    %v82 = vpow.pop %v81
    %v83 = vadd.f32 %v80, 1.0
    %v84 = vlog2.pop %v83
    %v85 = vmul.f32 %v84, 0.6931472
    %v86 = vmul.f32 -0.5, %v80
    %v87 = vadd.f32 %v86, 1.0
    %v88 = vmul.f32 %v87, %v80
    %v89 = vand.u32 2147483647, %v80
    %vm90 = vcmp.lt.f32.partialorder %v89, 0.0004427343
    %v91 = vsel %vm90, %v88, %v85
    %v92 = vadd.f32 %v82, 1.0
    %v93 = vlog2.pop %v92
    %v94 = vmul.f32 %v93, 0.6931472
    %v95 = vmul.f32 -0.5, %v82
    %v96 = vadd.f32 %v95, 1.0
    %v97 = vmul.f32 %v96, %v82
    %v98 = vand.u32 2147483647, %v82
    %vm99 = vcmp.lt.f32.partialorder %v98, 0.0004427343
    %v100 = vsel %vm99, %v97, %v94
    %v101 = vadd.f32 %v73, %v91
    %v102 = vadd.f32 %v74, %v100
    %v103 = vsub.f32 0.0, %v101
    %v104 = vsub.f32 0.0, %v102
    %v105 = vmul.f32 %v103, 1.442695
    %v106 = vpow.pop %v105
    %v107 = vmul.f32 %v104, 1.442695
    %v108 = vpow.pop %v107
    %v109 = vsub.f32 1.0, %v106
    %v110 = vsub.f32 1.0, %v108
    %v111 = vmul.f32 %v109, %v109
    %v112 = vmul.f32 %v110, %v110
    %v113 = vmul.f32 %v111, %v101
    %v114 = vmul.f32 %v112, %v102
    %s115 = sadd.s32 0, 0
    %s116 = smul.u32 %s115, 16
    %s117 = sadd.s32 %s116, 16
    %p118 = scmp.gt.s32.totalorder %s117, 16
    %p119 = scmp.le.s32.totalorder %s117, 16
    // Predicated region
    $region22: #{tpu_custom_call.1} parent=1 // pred_check
      %p120 = pneg %p119
    $region23: #{tpu_custom_call.1} parent=1 // pred_check_branch
      %122 = sbr.rel (%p120) target = $region25
    $region24: #{tpu_custom_call.1} parent=1 // pred_region
      %v123 = vld [vmem:[#allocation2] sm:$0xff]
      %v124 = vadd.f32 %v113, %v114
      %v125 = vadd.f32 %v123, %v124
      %126 = vst [vmem:[#allocation2] sm:$0xff] %v125
    $region25: #{tpu_custom_call.1} parent=1 // pred_fallthru
      _
    // Predicated region
    $region26: #{tpu_custom_call.1} parent=1 // pred_check
      %p127 = pneg %p118
    $region27: #{tpu_custom_call.1} parent=1 // pred_check_branch
      %129 = sbr.rel (%p127) target = $region29
    $region28: #{tpu_custom_call.1} parent=1 // pred_region
      %s130 = ssub.s32 16, %s116
      %v131 = vlaneseq
      %v132 = vshrl.u32 %v131, 7
      %v133 = vadd.s32 %v132, 8
      %v134 = vstv %s130
      %vm135 = vcmp.lt.s32.totalorder %v132, %v134
      %vm136 = vcmp.lt.s32.totalorder %v133, %v134
      %v137 = vsel %vm135, %v113, 0.0
      %v138 = vsel %vm136, %v114, 0.0
      %v139 = vld [vmem:[#allocation2] sm:$0xff]
      %v140 = vadd.f32 %v137, %v138
      %v141 = vadd.f32 %v139, %v140
      %142 = vst [vmem:[#allocation2] sm:$0xff] %v141
    $region29: #{tpu_custom_call.1} parent=1 // pred_fallthru
      _
    // Predicated region
    $region30: #{tpu_custom_call.1} parent=1 // pred_check
      %p143 = pneg %p60
    $region31: #{tpu_custom_call.1} parent=1 // pred_check_branch
      %145 = sbr.rel (%p143) target = $region33
    $region32: #{tpu_custom_call.1} parent=1 // pred_region
      %v146 = vld [vmem:[#allocation2] sm:$0xff]
      %147 = vadd.xlane.f32.xlu0 %v146
      %v148 = vpop.xlane.xlu0 %147
      %v149 = vrot.slane %v148, 4
      %v150 = vadd.f32 %v148, %v149
      %v151 = vrot.slane %v150, 2
      %v152 = vadd.f32 %v150, %v151
      %v153 = vrot.slane %v152, 1
      %v154 = vadd.f32 %v152, %v153
      %s155 = vtos %v154
      %s156 = scalar_lea.smem [#allocation8], 0
      %157 = sst [smem:[%s156]] %s155
    $region33: #{tpu_custom_call.1} parent=1 // pred_fallthru
      _
    // Predicated region
    $region34: #{tpu_custom_call.1} parent=1 // pred_check
      _
    $region35: #{tpu_custom_call.1} parent=1 // pred_check_branch
      %159 = sbr.rel (0) target = $region37
    $region36: #{tpu_custom_call.1} parent=1 // pred_region
      %s161 = ssub.s32 16, 16
      %162 = vsyncadd [#allocation5], %s161
      %165 = dma.smem_to_hbm [#allocation8], 16, %s2, [#allocation5]
    $region37: #{tpu_custom_call.1} parent=1 // pred_fallthru
      _
    // Predicated region
    $region38: #{tpu_custom_call.1} parent=1 // pred_check
      _
    $region39: #{tpu_custom_call.1} parent=1 // pred_check_branch
      %167 = sbr.rel (0) target = $region41
    $region40: #{tpu_custom_call.1} parent=1 // pred_region
      %168 = dma.done [#allocation5], 16
    $region41: #{tpu_custom_call.1} parent=1 // pred_fallthru
      _
    %169 = sfence
    %170 = vsyncpa [#allocation4], 1
    %171 = vsyncpa [#allocation7], 1
    %172 = vsyncpa [#allocation5], 1

</llo_original>
